<compile_context>
chip_gen: v5e
topology: v5e:2x2
jax: 0.10.0
libtpu: 0.0.40
codegen_flags: <defaults>
</compile_context>

<pallas_src>
import functools

import jax
import jax.numpy as jnp
from jax.experimental import pallas as pl
from jax.experimental.pallas import tpu as pltpu

_MIB = 1024 * 1024


def _vmem_capacity_bytes():
    """Per-core VMEM capacity; conservative (v7x) default if the query fails."""
    try:
        info = pltpu.get_tpu_info()
        for attr in ("vmem_capacity_bytes", "vmem_bytes"):
            v = getattr(info, attr, None)
            if v:
                return int(v)
    except Exception:
        pass
    return 64 * _MIB


# --------------------------------------------------------------------------
# Fused single-pass kernel: pool + FC + sigmoid + scale on a resident slab.
# --------------------------------------------------------------------------
def _fused_se_kernel(x_ref, w1_ref, b1_ref, w2_ref, b2_ref, o_ref, *, inv_hw):
    # x_ref/o_ref: (1, Cb, HW) activation slab, Cb = batch_block * C.
    # w1_ref: (Crb, Cb), b1_ref: (Crb, 1), w2_ref: (Cb, Crb), b2_ref: (Cb, 1)
    # (block-diagonal over the batch block, so one matvec serves all batches
    #  folded into this slab).
    x = x_ref[0]                                                    # (Cb, HW)
    mean = jnp.sum(x.astype(jnp.float32), axis=-1, keepdims=True) * inv_hw
    h = jnp.dot(w1_ref[...], mean, preferred_element_type=jnp.float32)
    h = jnp.maximum(h + b1_ref[...], 0.0)                           # (Crb, 1)
    g = jnp.dot(w2_ref[...], h, preferred_element_type=jnp.float32)
    g = jax.nn.sigmoid(g + b2_ref[...])                             # (Cb, 1)
    o_ref[0] = x * g.astype(x.dtype)


# --------------------------------------------------------------------------
# Fallback pass 1: per-(batch, channel) spatial sums over lane-dense tiles.
# --------------------------------------------------------------------------
def _pool_kernel(x_ref, sum_ref, *, hw, thw, ragged):
    # x_ref: (1, C, thw) spatial tile; sum_ref: (1, C, 1) accumulator resident
    # across the spatial (last, "arbitrary") grid axis.
    s = pl.program_id(1)

    @pl.when(s == 0)
    def _init():
        sum_ref[...] = jnp.zeros_like(sum_ref)

    x = x_ref[0].astype(jnp.float32)                                # (C, thw)
    if ragged:  # static flag: mask the padded lanes of the last partial tile
        lane = jax.lax.broadcasted_iota(jnp.int32, x.shape, 1) + s * thw
        x = jnp.where(lane < hw, x, 0.0)
    sum_ref[0] += jnp.sum(x, axis=-1, keepdims=True)                # (C, 1)


# --------------------------------------------------------------------------
# Fallback pass 2: broadcast-scale x by the per-channel gate (pure stream).
# --------------------------------------------------------------------------
def _scale_kernel(gate_ref, x_ref, o_ref):
    # gate_ref: (1, C, 1); x_ref, o_ref: (1, C, thw)
    x = x_ref[0]
    o_ref[0] = x * gate_ref[0].astype(x.dtype)


def _pick_spatial_tile(hw, c, itemsize, vmem_limit, max_tile_lanes=None):
    """Lane-dense spatial tile: multiple of 128 lanes, ~8 MiB target, with
    4 double-buffered (C, thw) tiles fitting in ~half the VMEM limit."""
    if hw <= 128:
        # TODO(synk): for HW < 128 with large C the tiles are lane-sparse; a
        # (B, HW, C) layout with C on the lane axis would be denser.
        return hw
    per_tile_cap = max(1, (vmem_limit // 2) // 4)
    cap_lanes = max(128, per_tile_cap // (c * itemsize) // 128 * 128)
    target_lanes = max(128, (8 * _MIB) // (c * itemsize) // 128 * 128)
    thw = min(cap_lanes, target_lanes)
    if max_tile_lanes is not None:
        thw = max(128, min(thw, max_tile_lanes // 128 * 128))
    return hw if thw >= hw else thw


def se_layer(x, w1, b1, w2, b2, *, force_two_pass=False, max_tile_lanes=None):
    """x: (B, C, H, W); w1: (Cr, C); b1: (Cr,); w2: (C, Cr); b2: (C,)."""
    B, C, H, W = x.shape
    Cr = w1.shape[0]
    HW = H * W
    itemsize = jnp.dtype(x.dtype).itemsize
    x_flat = x.reshape(B, C, HW)

    vmem_cap = _vmem_capacity_bytes()
    budget = vmem_cap - 16 * _MIB            # headroom for compiler scratch
    slab_bytes = C * HW * itemsize           # one batch's activation slab
    slab_f32 = C * HW * 4                    # f32 temporaries fudge
    wunit = Cr * C * 4                       # one FC weight matrix (f32)

    def fused_need(d):
        # d batches per step: in+out double-buffered, one f32 temp slab,
        # double-buffered block-diagonal weights, misc.
        return 4 * d * slab_bytes + d * slab_f32 + 4 * d * d * wunit + _MIB

    # ---------------------------------------------------------------------
    # Fused single-pass path: read x once, write out once (2x|x| traffic).
    # ---------------------------------------------------------------------
    if not force_two_pass and fused_need(1) <= budget:
        # Pick how many batches to fold into one grid step: keep >= 2 grid
        # steps (pipelining / megacore), target >= ~2 MiB of x per step, and
        # keep the block-diagonal weights small.
        bblk = 1
        limit = B if B < 2 else max(1, B // 2)
        for d in range(1, limit + 1):
            if B % d:
                continue
            if fused_need(d) > budget or d * d * wunit > _MIB:
                continue
            bblk = d
            if d * slab_bytes >= 2 * _MIB:
                break
        nb = B // bblk
        Cb = bblk * C
        Crb = bblk * Cr

        # Block-diagonal FC weights: kron(I_bblk, W) so one matvec serves all
        # batches merged into the channel axis of the slab.
        eye = jnp.eye(bblk, dtype=jnp.float32)
        w1b = jnp.kron(eye, w1.astype(jnp.float32))                # (Crb, Cb)
        w2b = jnp.kron(eye, w2.astype(jnp.float32))                # (Cb, Crb)
        b1b = jnp.tile(b1.astype(jnp.float32), bblk).reshape(Crb, 1)
        b2b = jnp.tile(b2.astype(jnp.float32), bblk).reshape(Cb, 1)

        x_blk = x_flat.reshape(nb, Cb, HW)     # merge batch block into channels
        vmem_limit = int(min(vmem_cap - 2 * _MIB,
                             max(32 * _MIB, fused_need(bblk) + 12 * _MIB)))

        out = pl.pallas_call(
            functools.partial(_fused_se_kernel, inv_hw=1.0 / HW),
            out_shape=jax.ShapeDtypeStruct((nb, Cb, HW), x.dtype),
            grid_spec=pltpu.PrefetchScalarGridSpec(
                num_scalar_prefetch=0,
                grid=(nb,),
                in_specs=[
                    pl.BlockSpec((1, Cb, HW), lambda i: (i, 0, 0)),
                    pl.BlockSpec((Crb, Cb), lambda i: (0, 0)),
                    pl.BlockSpec((Crb, 1), lambda i: (0, 0)),
                    pl.BlockSpec((Cb, Crb), lambda i: (0, 0)),
                    pl.BlockSpec((Cb, 1), lambda i: (0, 0)),
                ],
                out_specs=pl.BlockSpec((1, Cb, HW), lambda i: (i, 0, 0)),
            ),
            compiler_params=pltpu.CompilerParams(
                dimension_semantics=("parallel",),
                vmem_limit_bytes=vmem_limit),
        )(x_blk, w1b, b1b, w2b, b2b)
        return out.reshape(B, C, H, W)

    # ---------------------------------------------------------------------
    # Two-pass streaming fallback (per-batch slab too big for VMEM).
    # ---------------------------------------------------------------------
    vmem_limit_s = int(max(32 * _MIB, min(vmem_cap - 2 * _MIB, 64 * _MIB)))
    thw = _pick_spatial_tile(HW, C, itemsize, vmem_limit_s, max_tile_lanes)
    n_s = -(-HW // thw)
    ragged = (HW % thw) != 0

    # Pass 1: per-(batch, channel) spatial sums.
    sums = pl.pallas_call(
        functools.partial(_pool_kernel, hw=HW, thw=thw, ragged=ragged),
        out_shape=jax.ShapeDtypeStruct((B, C, 1), jnp.float32),
        grid_spec=pltpu.PrefetchScalarGridSpec(
            num_scalar_prefetch=0,
            grid=(B, n_s),
            in_specs=[pl.BlockSpec((1, C, thw), lambda b, s: (b, 0, s))],
            out_specs=pl.BlockSpec((1, C, 1), lambda b, s: (b, 0, 0)),
        ),
        compiler_params=pltpu.CompilerParams(
            dimension_semantics=("parallel", "arbitrary"),
            vmem_limit_bytes=vmem_limit_s),
    )(x_flat)

    # FC bottleneck: hoisted out of the kernel, batched over B as plain XLA
    # (the N=1 in-kernel matvec was <1% MXU utilization).
    pooled = sums[:, :, 0] * (1.0 / HW)                            # (B, C)
    hmid = jax.nn.relu(pooled @ w1.astype(jnp.float32).T
                       + b1.astype(jnp.float32))                   # (B, Cr)
    gate = jax.nn.sigmoid(hmid @ w2.astype(jnp.float32).T
                          + b2.astype(jnp.float32))[:, :, None]    # (B, C, 1)

    # Pass 2: broadcast-scale x by the gate.
    out_flat = pl.pallas_call(
        _scale_kernel,
        out_shape=jax.ShapeDtypeStruct((B, C, HW), x.dtype),
        grid_spec=pltpu.PrefetchScalarGridSpec(
            num_scalar_prefetch=0,
            grid=(B, n_s),
            in_specs=[
                pl.BlockSpec((1, C, 1), lambda b, s: (b, 0, 0)),
                pl.BlockSpec((1, C, thw), lambda b, s: (b, 0, s)),
            ],
            out_specs=pl.BlockSpec((1, C, thw), lambda b, s: (b, 0, s)),
        ),
        compiler_params=pltpu.CompilerParams(
            dimension_semantics=("parallel", "parallel"),
            vmem_limit_bytes=vmem_limit_s),
    )(gate, x_flat)

    return out_flat.reshape(B, C, H, W)


if __name__ == "__main__":
    key = jax.random.PRNGKey(0)
    k_x, k_w1, k_b1, k_w2, k_b2 = jax.random.split(key, 5)

    # channel=32 so that channel // reduction (reduction=16) is non-degenerate.
    B, C, H, W = 2, 32, 16, 16
    reduction = 16
    Cr = C // reduction

    x = jax.random.normal(k_x, (B, C, H, W), dtype=jnp.float32)

    # Synthetic Linear(C, Cr) / Linear(Cr, C) parameters.
    bound1 = 1.0 / (C ** 0.5)
    w1 = jax.random.uniform(k_w1, (Cr, C), minval=-bound1, maxval=bound1,
                            dtype=jnp.float32)
    b1 = jax.random.uniform(k_b1, (Cr,), minval=-bound1, maxval=bound1,
                            dtype=jnp.float32)
    bound2 = 1.0 / (Cr ** 0.5)
    w2 = jax.random.uniform(k_w2, (C, Cr), minval=-bound2, maxval=bound2,
                            dtype=jnp.float32)
    b2 = jax.random.uniform(k_b2, (C,), minval=-bound2, maxval=bound2,
                            dtype=jnp.float32)

    # Pure-JAX reference of SELayer.forward.
    pooled = jnp.mean(x, axis=(2, 3))                         # (B, C)
    h_ref = jax.nn.relu(pooled @ w1.T + b1)                   # (B, Cr)
    g_ref = jax.nn.sigmoid(h_ref @ w2.T + b2)                 # (B, C)
    ref = x * g_ref[:, :, None, None]

    # 1) Preferred fused single-pass path.
    out = jax.block_until_ready(se_layer(x, w1, b1, w2, b2))
    assert jnp.allclose(out, ref, atol=1e-5, rtol=1e-5), "fused path mismatch"

    # 2) Two-pass streaming fallback (forced, with small tiles so the spatial
    #    reduction actually spans several grid steps).
    out2 = jax.block_until_ready(
        se_layer(x, w1, b1, w2, b2, force_two_pass=True, max_tile_lanes=128))
    assert jnp.allclose(out2, ref, atol=1e-5, rtol=1e-5), "fallback mismatch"

    print("KERNEL_OK")
</pallas_src>

<mosaic_0001>
module attributes {stable_mosaic.version = 11 : i64} {
  func.func @_fused_se_kernel(%arg0: i32, %arg1: memref<1x32x256xf32, #tpu.memory_space<vmem>>, %arg2: memref<2x32xf32, #tpu.memory_space<vmem>>, %arg3: memref<2x1xf32, #tpu.memory_space<vmem>>, %arg4: memref<32x2xf32, #tpu.memory_space<vmem>>, %arg5: memref<32x1xf32, #tpu.memory_space<vmem>>, %arg6: memref<1x32x256xf32, #tpu.memory_space<vmem>>) attributes {dimension_semantics = [#tpu.dimension_semantics<parallel>], iteration_bounds = array<i64: 2>, scalar_prefetch = 0 : i64, scratch_operands = 0 : i64, tpu.core_type = #tpu.core_type<tc>, window_params = [{transform_indices = @transform_0, window_bounds = array<i64: 1, 32, 256>}, {pipeline_mode = #tpu.pipeline_mode<synchronous>, transform_indices = @transform_1, window_bounds = array<i64: 2, 32>}, {pipeline_mode = #tpu.pipeline_mode<synchronous>, transform_indices = @transform_2, window_bounds = array<i64: 2, 1>}, {pipeline_mode = #tpu.pipeline_mode<synchronous>, transform_indices = @transform_3, window_bounds = array<i64: 32, 2>}, {pipeline_mode = #tpu.pipeline_mode<synchronous>, transform_indices = @transform_4, window_bounds = array<i64: 32, 1>}, {transform_indices = @transform_5, window_bounds = array<i64: 1, 32, 256>}]} {
    %c0 = arith.constant 0 : index
    %c0_0 = arith.constant 0 : index
    %c0_1 = arith.constant 0 : index
    %0 = vector.load %arg1[%c0, %c0_0, %c0_1] : memref<1x32x256xf32, #tpu.memory_space<vmem>>, vector<1x32x256xf32>
    %1 = vector.shape_cast %0 : vector<1x32x256xf32> to vector<32x256xf32>
    %cst = arith.constant dense<0.000000e+00> : vector<32xf32>
    %2 = vector.multi_reduction <add>, %1, %cst [1] : vector<32x256xf32> to vector<32xf32>
    %3 = vector.shape_cast %2 : vector<32xf32> to vector<32x1xf32>
    %cst_2 = arith.constant 3.906250e-03 : f32
    %4 = vector.broadcast %cst_2 : f32 to vector<32x1xf32>
    %5 = arith.mulf %3, %4 : vector<32x1xf32>
    %c0_3 = arith.constant 0 : index
    %c0_4 = arith.constant 0 : index
    %6 = vector.load %arg2[%c0_3, %c0_4] : memref<2x32xf32, #tpu.memory_space<vmem>>, vector<2x32xf32>
    %cst_5 = arith.constant dense<0.000000e+00> : vector<2x1xf32>
    %7 = tpu.matmul %6, %5, %cst_5 {dimension_numbers = #tpu.dot_dimension_numbers<[1], [0], [0], [1], [0, 0, 1, 1], [], []>} : vector<2x32xf32>, vector<32x1xf32>, vector<2x1xf32> -> vector<2x1xf32>
    %c0_6 = arith.constant 0 : index
    %c0_7 = arith.constant 0 : index
    %8 = vector.load %arg3[%c0_6, %c0_7] : memref<2x1xf32, #tpu.memory_space<vmem>>, vector<2x1xf32>
    %9 = arith.addf %7, %8 : vector<2x1xf32>
    %cst_8 = arith.constant 0.000000e+00 : f32
    %10 = vector.broadcast %cst_8 : f32 to vector<2x1xf32>
    %11 = arith.maximumf %9, %10 : vector<2x1xf32>
    %c0_9 = arith.constant 0 : index
    %c0_10 = arith.constant 0 : index
    %12 = vector.load %arg4[%c0_9, %c0_10] : memref<32x2xf32, #tpu.memory_space<vmem>>, vector<32x2xf32>
    %cst_11 = arith.constant dense<0.000000e+00> : vector<32x1xf32>
    %13 = tpu.matmul %12, %11, %cst_11 {dimension_numbers = #tpu.dot_dimension_numbers<[1], [0], [0], [1], [0, 0, 1, 1], [], []>} : vector<32x2xf32>, vector<2x1xf32>, vector<32x1xf32> -> vector<32x1xf32>
    %c0_12 = arith.constant 0 : index
    %c0_13 = arith.constant 0 : index
    %14 = vector.load %arg5[%c0_12, %c0_13] : memref<32x1xf32, #tpu.memory_space<vmem>>, vector<32x1xf32>
    %15 = arith.addf %13, %14 : vector<32x1xf32>
    %16 = arith.negf %15 : vector<32x1xf32>
    %17 = math.exp %16 : vector<32x1xf32>
    %cst_14 = arith.constant 1.000000e+00 : f32
    %18 = vector.broadcast %cst_14 : f32 to vector<32x1xf32>
    %19 = arith.addf %18, %17 : vector<32x1xf32>
    %20 = arith.divf %18, %19 : vector<32x1xf32>
    %21 = vector.broadcast %20 : vector<32x1xf32> to vector<32x256xf32>
    %22 = arith.mulf %1, %21 : vector<32x256xf32>
    %c0_15 = arith.constant 0 : index
    %c0_16 = arith.constant 0 : index
    %c0_17 = arith.constant 0 : index
    %23 = vector.load %arg6[%c0_15, %c0_16, %c0_17] : memref<1x32x256xf32, #tpu.memory_space<vmem>>, vector<1x32x256xf32>
    %24 = vector.shape_cast %23 : vector<1x32x256xf32> to vector<32x256xf32>
    %25 = vector.shape_cast %22 : vector<32x256xf32> to vector<1x32x256xf32>
    tpu.vector_store %arg6[%c0_15, %c0_16, %c0_17], %25 {strides = array<i32>} : memref<1x32x256xf32, #tpu.memory_space<vmem>>, vector<1x32x256xf32>,
    return
  }
  func.func @transform_0(%arg0: i32) -> (i32, i32, i32) {
    %c0_i32 = arith.constant 0 : i32
    %c0_i32_0 = arith.constant 0 : i32
    %c0_i32_1 = arith.constant 0 : i32
    return %arg0, %c0_i32, %c0_i32_0 : i32, i32, i32
  }
  func.func @transform_1(%arg0: i32) -> (i32, i32) {
    %c0_i32 = arith.constant 0 : i32
    %c0_i32_0 = arith.constant 0 : i32
    %c0_i32_1 = arith.constant 0 : i32
    return %c0_i32, %c0_i32_0 : i32, i32
  }
  func.func @transform_2(%arg0: i32) -> (i32, i32) {
    %c0_i32 = arith.constant 0 : i32
    %c0_i32_0 = arith.constant 0 : i32
    %c0_i32_1 = arith.constant 0 : i32
    return %c0_i32, %c0_i32_0 : i32, i32
  }
  func.func @transform_3(%arg0: i32) -> (i32, i32) {
    %c0_i32 = arith.constant 0 : i32
    %c0_i32_0 = arith.constant 0 : i32
    %c0_i32_1 = arith.constant 0 : i32
    return %c0_i32, %c0_i32_0 : i32, i32
  }
  func.func @transform_4(%arg0: i32) -> (i32, i32) {
    %c0_i32 = arith.constant 0 : i32
    %c0_i32_0 = arith.constant 0 : i32
    %c0_i32_1 = arith.constant 0 : i32
    return %c0_i32, %c0_i32_0 : i32, i32
  }
  func.func @transform_5(%arg0: i32) -> (i32, i32, i32) {
    %c0_i32 = arith.constant 0 : i32
    %c0_i32_0 = arith.constant 0 : i32
    %c0_i32_1 = arith.constant 0 : i32
    return %arg0, %c0_i32, %c0_i32_0 : i32, i32, i32
  }
}

</mosaic_0001>

<llo_original>
// kernel: tpu_custom_call.1
$region0: #{tpu_custom_call.1}
  #allocation0 [shape = 'u32[]', space=smem, size = 0x4, offset = 0x4, fixed_abs, tag = 'smem constant byte address 0x4 - core index']
  #allocation1 [shape = 'u32[72,128]{1,0:T(1,128)}', space=vmem, size = 0x9000, scoped, tag = 'internal scratch']
  %s0 = inlined_call_operand.hbm [shape: f32[2,32,256], index: 0, kind: input, shape index: {}]
  %s1 = inlined_call_operand.vmem [shape: f32[2,32], index: 1, kind: input, shape index: {}]
  %s2 = inlined_call_operand.vmem [shape: f32[2,1], index: 2, kind: input, shape index: {}]
  %s3 = inlined_call_operand.vmem [shape: f32[32,2], index: 3, kind: input, shape index: {}]
  %s4 = inlined_call_operand.vmem [shape: f32[32,1], index: 4, kind: input, shape index: {}]
  %s5 = inlined_call_operand.hbm [shape: f32[2,32,256], index: 5, kind: output, shape index: {}]
  %s6 = sld [smem:[#allocation0]]
  $region57: #{tpu_custom_call.1} parent=0
    _
  %s8 = ssub.s32 1, %s6
  %s9 = scalar_select 0, %s8, %s6
  $region1: #{tpu_custom_call.1} parent=0
    #allocation2 [shape = 'u8[65536]{0}', space=vmem, size = 0x10000, scoped, tag = 'input window, operand 0']
    #allocation3 [shape = 's32[2]{0}', space=sflag, size = 0x8, scoped, tag = 'scoped memory for tpu_custom_call.1']
    #allocation4 [shape = 's32[2]{0}', space=sflag, size = 0x8, scoped, tag = 'scoped memory for tpu_custom_call.1']
    #allocation5 [shape = 'u8[65536]{0}', space=vmem, size = 0x10000, scoped, tag = 'output window, operand 0']
    %10 = vsyncpa [#allocation3], 0
    %s11 = scalar_lea.sflag [#allocation3], 1
    %12 = vsyncpa %s11, 0
    %13 = vsyncpa [#allocation4], 0
    %s14 = scalar_lea.sflag [#allocation4], 1
    %15 = vsyncpa %s14, 0
    loop: start=0, step=1, limit=4
    $region2: #{tpu_custom_call.1} parent=1 // loop_pre_header
      _
    $region3: #{tpu_custom_call.1} parent=1 // loop_header
      %s17 = sphi 0, %s21
      %p18 = scmp.ge.s32.totalorder %s17, 4
      %s27 = sphi 0, %s29
      %s30 = sphi 0, %s27
      %s31 = sphi 0, %s30
      %s47 = sphi 0, %s31
      %s51 = sphi 0, %s51
      %s53 = sphi 0, %s51
      %s54 = sphi 0, %s53
      %s68 = sphi 0, %s54
      %s72 = sphi 0, %s72
      %s74 = sphi 0, %s72
      %s75 = sphi 0, %s74
      %s89 = sphi 0, %s75
      %s93 = sphi 0, %s93
      %s95 = sphi 0, %s93
      %s96 = sphi 0, %s95
      %s110 = sphi 0, %s96
      %s114 = sphi 0, %s114
      %s116 = sphi 0, %s114
      %s117 = sphi 0, %s116
      %s131 = sphi 0, %s117
      %s137 = sphi 0, %s139
      %s140 = sphi 0, %s137
      %s141 = sphi 0, %s140
      %s157 = sphi 0, %s141
    $region4: #{tpu_custom_call.1} parent=1 // loop_header_branch
      %20 = sbr.rel (%p18) target = $region8
    $region5: #{tpu_custom_call.1} parent=1 // loop_body
      %s22 = ssub.s32 %s17, 1
      %s23 = ssub.s32 %s17, 2
      %s24 = sadd.s32 %s17, 1
      %s25 = ssub.s32 %s17, %s24
      %p26 = scmp.eq.s32.totalorder %s25, 0
      %s28 = sadd.s32 %s27, 1
      %s29 = scalar_select %p26, %s27, %s28
      %p32 = pneg %p26
      %p33 = scmp.eq.s32.totalorder %s17, 1
      %p34 = por %p32, %p33
      %p35 = scmp.ne.s32.totalorder %s27, %s30
      %p36 = scmp.eq.s32.totalorder %s17, 0
      %p37 = por %p35, %p36
      %p38 = scmp.ne.s32.totalorder %s27, %s30
      %p39 = scmp.eq.s32.totalorder %s22, 1
      %p40 = por %p38, %p39
      %p41 = scmp.ne.s32.totalorder %s30, %s31
      %p42 = scmp.eq.s32.totalorder %s22, 0
      %p43 = por %p41, %p42
      %p44 = scmp.ne.s32.totalorder %s30, %s31
      %p45 = scmp.eq.s32.totalorder %s23, 1
      %p46 = por %p44, %p45
      %p48 = scmp.ne.s32.totalorder %s31, %s47
      %p49 = scmp.eq.s32.totalorder %s23, 0
      %p50 = por %p48, %p49
      %s52 = sadd.s32 %s51, 1
      %p55 = scmp.eq.s32.totalorder %s17, 1
      %p56 = scmp.ne.s32.totalorder %s51, %s53
      %p57 = scmp.eq.s32.totalorder %s17, 0
      %p58 = por %p56, %p57
      %p59 = scmp.ne.s32.totalorder %s51, %s53
      %p60 = scmp.eq.s32.totalorder %s22, 1
      %p61 = por %p59, %p60
      %p62 = scmp.ne.s32.totalorder %s53, %s54
      %p63 = scmp.eq.s32.totalorder %s22, 0
      %p64 = por %p62, %p63
      %p65 = scmp.ne.s32.totalorder %s53, %s54
      %p66 = scmp.eq.s32.totalorder %s23, 1
      %p67 = por %p65, %p66
      %p69 = scmp.ne.s32.totalorder %s54, %s68
      %p70 = scmp.eq.s32.totalorder %s23, 0
      %p71 = por %p69, %p70
      %s73 = sadd.s32 %s72, 1
      %p76 = scmp.eq.s32.totalorder %s17, 1
      %p77 = scmp.ne.s32.totalorder %s72, %s74
      %p78 = scmp.eq.s32.totalorder %s17, 0
      %p79 = por %p77, %p78
      %p80 = scmp.ne.s32.totalorder %s72, %s74
      %p81 = scmp.eq.s32.totalorder %s22, 1
      %p82 = por %p80, %p81
      %p83 = scmp.ne.s32.totalorder %s74, %s75
      %p84 = scmp.eq.s32.totalorder %s22, 0
      %p85 = por %p83, %p84
      %p86 = scmp.ne.s32.totalorder %s74, %s75
      %p87 = scmp.eq.s32.totalorder %s23, 1
      %p88 = por %p86, %p87
      %p90 = scmp.ne.s32.totalorder %s75, %s89
      %p91 = scmp.eq.s32.totalorder %s23, 0
      %p92 = por %p90, %p91
      %s94 = sadd.s32 %s93, 1
      %p97 = scmp.eq.s32.totalorder %s17, 1
      %p98 = scmp.ne.s32.totalorder %s93, %s95
      %p99 = scmp.eq.s32.totalorder %s17, 0
      %p100 = por %p98, %p99
      %p101 = scmp.ne.s32.totalorder %s93, %s95
      %p102 = scmp.eq.s32.totalorder %s22, 1
      %p103 = por %p101, %p102
      %p104 = scmp.ne.s32.totalorder %s95, %s96
      %p105 = scmp.eq.s32.totalorder %s22, 0
      %p106 = por %p104, %p105
      %p107 = scmp.ne.s32.totalorder %s95, %s96
      %p108 = scmp.eq.s32.totalorder %s23, 1
      %p109 = por %p107, %p108
      %p111 = scmp.ne.s32.totalorder %s96, %s110
      %p112 = scmp.eq.s32.totalorder %s23, 0
      %p113 = por %p111, %p112
      %s115 = sadd.s32 %s114, 1
      %p118 = scmp.eq.s32.totalorder %s17, 1
      %p119 = scmp.ne.s32.totalorder %s114, %s116
      %p120 = scmp.eq.s32.totalorder %s17, 0
      %p121 = por %p119, %p120
      %p122 = scmp.ne.s32.totalorder %s114, %s116
      %p123 = scmp.eq.s32.totalorder %s22, 1
      %p124 = por %p122, %p123
      %p125 = scmp.ne.s32.totalorder %s116, %s117
      %p126 = scmp.eq.s32.totalorder %s22, 0
      %p127 = por %p125, %p126
      %p128 = scmp.ne.s32.totalorder %s116, %s117
      %p129 = scmp.eq.s32.totalorder %s23, 1
      %p130 = por %p128, %p129
      %p132 = scmp.ne.s32.totalorder %s117, %s131
      %p133 = scmp.eq.s32.totalorder %s23, 0
      %p134 = por %p132, %p133
      %s135 = ssub.s32 %s17, %s24
      %p136 = scmp.eq.s32.totalorder %s135, 0
      %s138 = sadd.s32 %s137, 1
      %s139 = scalar_select %p136, %s137, %s138
      %p142 = pneg %p136
      %p143 = scmp.eq.s32.totalorder %s17, 1
      %p144 = por %p142, %p143
      %p145 = scmp.ne.s32.totalorder %s137, %s140
      %p146 = scmp.eq.s32.totalorder %s17, 0
      %p147 = por %p145, %p146
      %p148 = scmp.ne.s32.totalorder %s137, %s140
      %p149 = scmp.eq.s32.totalorder %s22, 1
      %p150 = por %p148, %p149
      %p151 = scmp.ne.s32.totalorder %s140, %s141
      %p152 = scmp.eq.s32.totalorder %s22, 0
      %p153 = por %p151, %p152
      %p154 = scmp.ne.s32.totalorder %s140, %s141
      %p155 = scmp.eq.s32.totalorder %s23, 1
      %p156 = por %p154, %p155
      %p158 = scmp.ne.s32.totalorder %s141, %s157
      %p159 = scmp.eq.s32.totalorder %s23, 0
      %p160 = por %p158, %p159
      %p161 = scmp.le.s32.totalorder 1, %s17
      %p162 = scmp.lt.s32.totalorder %s17, 3
      %p163 = pnand %p161, %p162
      %p164 = pneg %p163
      // Predicated region
      $region9: #{tpu_custom_call.1} parent=5 // pred_check
        _
      $region10: #{tpu_custom_call.1} parent=5 // pred_check_branch
        %166 = sbr.rel (%p163) target = $region12
      $region11: #{tpu_custom_call.1} parent=5 // pred_region
        %s167 = ssub.s32 %s17, 1
        // Predicated region
        $region13: #{tpu_custom_call.1} parent=11 // pred_check
          %p168 = pneg %p64
        $region14: #{tpu_custom_call.1} parent=11 // pred_check_branch
          %170 = sbr.rel (%p168) target = $region16
        $region15: #{tpu_custom_call.1} parent=11 // pred_region
          _
        $region16: #{tpu_custom_call.1} parent=11 // pred_fallthru
          _
        // Predicated region
        $region17: #{tpu_custom_call.1} parent=11 // pred_check
          %p171 = pneg %p85
        $region18: #{tpu_custom_call.1} parent=11 // pred_check_branch
          %173 = sbr.rel (%p171) target = $region20
        $region19: #{tpu_custom_call.1} parent=11 // pred_region
          _
        $region20: #{tpu_custom_call.1} parent=11 // pred_fallthru
          _
        // Predicated region
        $region21: #{tpu_custom_call.1} parent=11 // pred_check
          %p174 = pneg %p106
        $region22: #{tpu_custom_call.1} parent=11 // pred_check_branch
          %176 = sbr.rel (%p174) target = $region24
        $region23: #{tpu_custom_call.1} parent=11 // pred_region
          _
        $region24: #{tpu_custom_call.1} parent=11 // pred_fallthru
          _
        // Predicated region
        $region25: #{tpu_custom_call.1} parent=11 // pred_check
          %p177 = pneg %p127
        $region26: #{tpu_custom_call.1} parent=11 // pred_check_branch
          %179 = sbr.rel (%p177) target = $region28
        $region27: #{tpu_custom_call.1} parent=11 // pred_region
          _
        $region28: #{tpu_custom_call.1} parent=11 // pred_fallthru
          _
      $region12: #{tpu_custom_call.1} parent=5 // pred_fallthru
        _
      %p180 = scmp.lt.s32.totalorder %s17, 2
      // Predicated region
      $region29: #{tpu_custom_call.1} parent=5 // pred_check
        %p181 = pneg %p180
      $region30: #{tpu_custom_call.1} parent=5 // pred_check_branch
        %183 = sbr.rel (%p181) target = $region32
      $region31: #{tpu_custom_call.1} parent=5 // pred_region
        // Predicated region
        $region33: #{tpu_custom_call.1} parent=31 // pred_check
          %p184 = pneg %p37
        $region34: #{tpu_custom_call.1} parent=31 // pred_check_branch
          %186 = sbr.rel (%p184) target = $region36
        $region35: #{tpu_custom_call.1} parent=31 // pred_region
          %s187 = sand.u32 %s27, 1
          %s188 = scalar_lea.sflag [#allocation3], %s187
          %s189 = sand.u32 %s27, 1
          %s190 = smul.addr %s189, 64
          %s191 = scalar_lea.vmem [#allocation2], %s190
          %193 = vsyncadd %s188, 0
          %s194 = smul.addr %s17, 8
          %s195 = smul.addr %s194, 8
          %s196 = scalar_lea.hbm %s0, %s195
          %s197 = sshll.u32 %s196, 4
          %s198 = int_to_ptr.hbm [resolvable:$true] %s197
          %s199 = sshll.u32 %s191, 4
          %s200 = int_to_ptr.vmem [resolvable:$true] %s199
          %205 = dma.hbm_to_vmem [thread:$0]  %s198, 1024, %s200, %s188, 256, 256, 16
        $region36: #{tpu_custom_call.1} parent=31 // pred_fallthru
          _
      $region32: #{tpu_custom_call.1} parent=5 // pred_fallthru
        _
      %p206 = scmp.le.s32.totalorder 1, %s17
      %p207 = scmp.lt.s32.totalorder %s17, 3
      %p208 = pnand %p206, %p207
      %p209 = pneg %p208
      // Predicated region
      $region37: #{tpu_custom_call.1} parent=5 // pred_check
        _
      $region38: #{tpu_custom_call.1} parent=5 // pred_check_branch
        %211 = sbr.rel (%p208) target = $region40
      $region39: #{tpu_custom_call.1} parent=5 // pred_region
        %s212 = ssub.s32 %s17, 1
        %s213 = sand.u32 %s30, 1
        %s214 = scalar_lea.sflag [#allocation3], %s213
        %s215 = sand.u32 %s30, 1
        %s216 = smul.addr %s215, 64
        %s217 = scalar_lea.vmem [#allocation2], %s216
        // Predicated region
        $region41: #{tpu_custom_call.1} parent=39 // pred_check
          %p218 = pneg %p43
        $region42: #{tpu_custom_call.1} parent=39 // pred_check_branch
          %220 = sbr.rel (%p218) target = $region44
        $region43: #{tpu_custom_call.1} parent=39 // pred_region
          %222 = dma.done %s214, 1024
        $region44: #{tpu_custom_call.1} parent=39 // pred_fallthru
          _
        %s223 = sand.u32 %s30, 1
        %s224 = scalar_lea.sflag [#allocation3], %s223
        %s225 = sand.u32 %s30, 1
        %s226 = smul.addr %s225, 64
        %s227 = scalar_lea.vmem [#allocation2], %s226
        %p228 = pneg %p43
        %p229 = pneg %p40
        %p230 = pneg %p64
        %p231 = pneg %p61
        %p232 = pneg %p85
        %p233 = pneg %p82
        %p234 = pneg %p106
        %p235 = pneg %p103
        %p236 = pneg %p127
        %p237 = pneg %p124
        %p238 = pneg %p153
        %p239 = pneg %p150
        %s240 = sand.u32 %s140, 1
        %s241 = scalar_lea.sflag [#allocation4], %s240
        %s242 = sand.u32 %s140, 1
        %s243 = smul.addr %s242, 64
        %s244 = scalar_lea.vmem [#allocation5], %s243
        %v245 = vld [vmem:[%s217] sm:$0xff]
        %v246 = vld [vmem:[%s217 + $0x8] sm:$0xff]
        %v247 = vld [vmem:[%s217 + $0x10] sm:$0xff]
        %v248 = vld [vmem:[%s217 + $0x18] sm:$0xff]
        %v249 = vld [vmem:[%s217 + $0x20] sm:$0xff]
        %v250 = vld [vmem:[%s217 + $0x28] sm:$0xff]
        %v251 = vld [vmem:[%s217 + $0x30] sm:$0xff]
        %v252 = vld [vmem:[%s217 + $0x38] sm:$0xff]
        %v253 = vadd.f32 %v245, %v246
        %254 = vadd.xlane.f32.xlu0 %v253
        %v255 = vpop.xlane.xlu0 %254
        %v256 = vadd.f32 %v247, %v248
        %257 = vadd.xlane.f32.xlu0 %v256
        %v258 = vpop.xlane.xlu0 %257
        %v259 = vadd.f32 %v249, %v250
        %260 = vadd.xlane.f32.xlu0 %v259
        %v261 = vpop.xlane.xlu0 %260
        %v262 = vadd.f32 %v251, %v252
        %263 = vadd.xlane.f32.xlu0 %v262
        %v264 = vpop.xlane.xlu0 %263
        %v265 = vmul.f32 %v255, 0.00390625
        %v266 = vmul.f32 %v258, 0.00390625
        %v267 = vmul.f32 %v261, 0.00390625
        %v268 = vmul.f32 %v264, 0.00390625
        %v269 = vld [vmem:[%s1] sm:$0x3]
        %v270 = vld [vmem:[%s2] sm:$0x3]
        %vm271 = vcmask 261120
        %v273 = vsel %vm271, %v269, 0
        %275 = vmatpush.msra.mxu0 0.0
        %276 = vmatpush.msra.mxu0 0.0
        %277 = vmatpush.msra.mxu0 0.0
        %278 = vmatpush.msra.mxu0 0.0
        %279 = vmatpush.msra.mxu0 0.0
        %280 = vmatpush.msra.mxu0 0.0
        %281 = vmatpush.msra.mxu0 0.0
        %282 = vmatpush.msra.mxu0 0.0
        %283 = vmatpush.msra.mxu0 0.0
        %284 = vmatpush.msra.mxu0 0.0
        %285 = vmatpush.msra.mxu0 0.0
        %286 = vmatpush.msra.mxu0 0.0
        %287 = vmatpush.msra.mxu0 %v268
        %288 = vmatpush.msra.mxu0 %v267
        %289 = vmatpush.msra.mxu0 %v266
        %290 = vmatpush.msra.mxu0 %v265
        %291 = vmatmul.f32.gmra.mxu0 %v273
        %v292 = vpop.f32.mrf.mxu0
        %v293 = vadd.f32 %v270, %v292
        %294 = vdwg.mxu0
        %v295 = vmax.f32 %v293, 0.0
        %v296 = vld [vmem:[%s3] sm:$0xff]
        %v297 = vld [vmem:[%s3 + $0x8] sm:$0xff]
        %v298 = vld [vmem:[%s3 + $0x10] sm:$0xff]
        %v299 = vld [vmem:[%s3 + $0x18] sm:$0xff]
        %v300 = vld [vmem:[%s4] sm:$0xff]
        %v301 = vld [vmem:[%s4 + $0x8] sm:$0xff]
        %v302 = vld [vmem:[%s4 + $0x10] sm:$0xff]
        %v303 = vld [vmem:[%s4 + $0x18] sm:$0xff]
        %vm304 = vcmask 15360
        %v306 = vsel %vm304, %v296, 0
        %v309 = vsel %vm304, %v297, 0
        %v312 = vsel %vm304, %v298, 0
        %v315 = vsel %vm304, %v299, 0
        %vm317 = vcmask 1041408
        %v319 = vsel %vm317, %v295, 0
        %321 = vmatpush.msra.mxu0 0.0
        %322 = vmatpush.msra.mxu0 0.0
        %323 = vmatpush.msra.mxu0 0.0
        %324 = vmatpush.msra.mxu0 0.0
        %325 = vmatpush.msra.mxu0 0.0
        %326 = vmatpush.msra.mxu0 0.0
        %327 = vmatpush.msra.mxu0 0.0
        %328 = vmatpush.msra.mxu0 0.0
        %329 = vmatpush.msra.mxu0 0.0
        %330 = vmatpush.msra.mxu0 0.0
        %331 = vmatpush.msra.mxu0 0.0
        %332 = vmatpush.msra.mxu0 0.0
        %333 = vmatpush.msra.mxu0 0.0
        %334 = vmatpush.msra.mxu0 0.0
        %335 = vmatpush.msra.mxu0 0.0
        %336 = vmatpush.msra.mxu0 %v319
        %337 = vmatmul.f32.gmra.mxu0 %v306
        %v338 = vpop.f32.mrf.mxu0
        %v339 = vadd.f32 %v300, %v338
        %340 = vmatmul.f32.gmra.mxu0 %v309
        %v341 = vpop.f32.mrf.mxu0
        %v342 = vadd.f32 %v301, %v341
        %343 = vmatmul.f32.gmra.mxu0 %v312
        %v344 = vpop.f32.mrf.mxu0
        %v345 = vadd.f32 %v302, %v344
        %346 = vmatmul.f32.gmra.mxu0 %v315
        %v347 = vpop.f32.mrf.mxu0
        %v348 = vadd.f32 %v303, %v347
        %349 = vdwg.mxu0
        %v350 = vxor.u32 %v339, 2147483648
        %v351 = vxor.u32 %v342, 2147483648
        %v352 = vxor.u32 %v345, 2147483648
        %v353 = vxor.u32 %v348, 2147483648
        %v354 = vmul.f32 %v350, 1.442695
        %v355 = vpow.pop %v354
        %v356 = vmul.f32 %v351, 1.442695
        %v357 = vpow.pop %v356
        %v358 = vmul.f32 %v352, 1.442695
        %v359 = vpow.pop %v358
        %v360 = vmul.f32 %v353, 1.442695
        %v361 = vpow.pop %v360
        %v362 = vadd.f32 %v355, 1.0
        %v363 = vadd.f32 %v357, 1.0
        %v364 = vadd.f32 %v359, 1.0
        %v365 = vadd.f32 %v361, 1.0
        %v366 = vrcp.pop %v362
        %v367 = vmul.f32 %v362, %v366
        %v368 = vsub.f32 1.0, %v367
        %v369 = vmul.f32 %v366, %v368
        %v370 = vadd.f32 %v366, %v369
        %vm371 = vweird.f32 %v362
        %vm372 = vweird.f32 %v366
        %vm373 = vmor %vm371, %vm372
        %v374 = vsel %vm373, %v366, %v370
        %v375 = vand.u32 2147483647, %v362
        %vm376 = vcmp.eq.f32.partialorder %v375, 8.507059e+37
        %v377 = vand.u32 %v362, 2147483648
        %v378 = vor.u32 1.1754944e-38, %v377
        %v379 = vsel %vm376, %v378, %v374
        %v380 = vmul.f32 1.0, %v379
        %v381 = vrcp.pop %v363
        %v382 = vmul.f32 %v363, %v381
        %v383 = vsub.f32 1.0, %v382
        %v384 = vmul.f32 %v381, %v383
        %v385 = vadd.f32 %v381, %v384
        %vm386 = vweird.f32 %v363
        %vm387 = vweird.f32 %v381
        %vm388 = vmor %vm386, %vm387
        %v389 = vsel %vm388, %v381, %v385
        %v390 = vand.u32 2147483647, %v363
        %vm391 = vcmp.eq.f32.partialorder %v390, 8.507059e+37
        %v392 = vand.u32 %v363, 2147483648
        %v393 = vor.u32 1.1754944e-38, %v392
        %v394 = vsel %vm391, %v393, %v389
        %v395 = vmul.f32 1.0, %v394
        %v396 = vrcp.pop %v364
        %v397 = vmul.f32 %v364, %v396
        %v398 = vsub.f32 1.0, %v397
        %v399 = vmul.f32 %v396, %v398
        %v400 = vadd.f32 %v396, %v399
        %vm401 = vweird.f32 %v364
        %vm402 = vweird.f32 %v396
        %vm403 = vmor %vm401, %vm402
        %v404 = vsel %vm403, %v396, %v400
        %v405 = vand.u32 2147483647, %v364
        %vm406 = vcmp.eq.f32.partialorder %v405, 8.507059e+37
        %v407 = vand.u32 %v364, 2147483648
        %v408 = vor.u32 1.1754944e-38, %v407
        %v409 = vsel %vm406, %v408, %v404
        %v410 = vmul.f32 1.0, %v409
        %v411 = vrcp.pop %v365
        %v412 = vmul.f32 %v365, %v411
        %v413 = vsub.f32 1.0, %v412
        %v414 = vmul.f32 %v411, %v413
        %v415 = vadd.f32 %v411, %v414
        %vm416 = vweird.f32 %v365
        %vm417 = vweird.f32 %v411
        %vm418 = vmor %vm416, %vm417
        %v419 = vsel %vm418, %v411, %v415
        %v420 = vand.u32 2147483647, %v365
        %vm421 = vcmp.eq.f32.partialorder %v420, 8.507059e+37
        %v422 = vand.u32 %v365, 2147483648
        %v423 = vor.u32 1.1754944e-38, %v422
        %v424 = vsel %vm421, %v423, %v419
        %v425 = vmul.f32 1.0, %v424
        %427 = vset.pattern.permute.xlu0 0
        %428 = vperm.xlu0 %427, %v380
        %v429 = vpop.permute.xlu0 %428
        %432 = vset.pattern.permute.xlu0 0
        %433 = vperm.xlu0 %432, %v395
        %v434 = vpop.permute.xlu0 %433
        %437 = vset.pattern.permute.xlu0 0
        %438 = vperm.xlu0 %437, %v410
        %v439 = vpop.permute.xlu0 %438
        %442 = vset.pattern.permute.xlu0 0
        %443 = vperm.xlu0 %442, %v425
        %v444 = vpop.permute.xlu0 %443
        %v446 = vmul.f32 %v245, %v429
        %v447 = vmul.f32 %v246, %v429
        %v448 = vmul.f32 %v247, %v434
        %v449 = vmul.f32 %v248, %v434
        %v450 = vmul.f32 %v249, %v439
        %v451 = vmul.f32 %v250, %v439
        %v452 = vmul.f32 %v251, %v444
        %v453 = vmul.f32 %v252, %v444
        %454 = vst [vmem:[%s244] sm:$0xff] %v446
        %455 = vst [vmem:[%s244 + $0x8] sm:$0xff] %v447
        %456 = vst [vmem:[%s244 + $0x10] sm:$0xff] %v448
        %457 = vst [vmem:[%s244 + $0x18] sm:$0xff] %v449
        %458 = vst [vmem:[%s244 + $0x20] sm:$0xff] %v450
        %459 = vst [vmem:[%s244 + $0x28] sm:$0xff] %v451
        %460 = vst [vmem:[%s244 + $0x30] sm:$0xff] %v452
        %461 = vst [vmem:[%s244 + $0x38] sm:$0xff] %v453
        %s462 = sand.u32 %s140, 1
        %s463 = scalar_lea.sflag [#allocation4], %s462
        %s464 = sand.u32 %s140, 1
        %s465 = smul.addr %s464, 64
        %s466 = scalar_lea.vmem [#allocation5], %s465
        // Predicated region
        $region45: #{tpu_custom_call.1} parent=39 // pred_check
          %p467 = pneg %p150
        $region46: #{tpu_custom_call.1} parent=39 // pred_check_branch
          %469 = sbr.rel (%p467) target = $region48
        $region47: #{tpu_custom_call.1} parent=39 // pred_region
          %471 = vsyncadd %s463, 0
          %s472 = smul.addr %s22, 8
          %s473 = smul.addr %s472, 8
          %s474 = scalar_lea.hbm %s5, %s473
          %s475 = sshll.u32 %s466, 4
          %s476 = int_to_ptr.vmem [resolvable:$true] %s475
          %s477 = sshll.u32 %s474, 4
          %s478 = int_to_ptr.hbm [resolvable:$true] %s477
          %483 = dma.vmem_to_hbm [thread:$0]  %s476, 1024, %s478, %s463, 256, 256, 16
        $region48: #{tpu_custom_call.1} parent=39 // pred_fallthru
          _
      $region40: #{tpu_custom_call.1} parent=5 // pred_fallthru
        _
      %p484 = scmp.le.s32.totalorder 2, %s17
      // Predicated region
      $region49: #{tpu_custom_call.1} parent=5 // pred_check
        %p485 = pneg %p484
      $region50: #{tpu_custom_call.1} parent=5 // pred_check_branch
        %487 = sbr.rel (%p485) target = $region52
      $region51: #{tpu_custom_call.1} parent=5 // pred_region
        %s488 = ssub.s32 %s17, 2
        // Predicated region
        $region53: #{tpu_custom_call.1} parent=51 // pred_check
          %p489 = pneg %p156
        $region54: #{tpu_custom_call.1} parent=51 // pred_check_branch
          %491 = sbr.rel (%p489) target = $region56
        $region55: #{tpu_custom_call.1} parent=51 // pred_region
          %s492 = sand.u32 %s141, 1
          %s493 = scalar_lea.sflag [#allocation4], %s492
          %s494 = sand.u32 %s141, 1
          %s495 = smul.addr %s494, 64
          %s496 = scalar_lea.vmem [#allocation5], %s495
          %498 = dma.done %s493, 1024
        $region56: #{tpu_custom_call.1} parent=51 // pred_fallthru
          _
      $region52: #{tpu_custom_call.1} parent=5 // pred_fallthru
        _
    $region6: #{tpu_custom_call.1} parent=1 // loop_footer
      %s21 = sadd.s32 1, %s17
    $region7: #{tpu_custom_call.1} parent=1 // loop_footer_branch
      %16 = sbr.rel target = $region3
    $region8: #{tpu_custom_call.1} parent=1 // loop_exit
      _
    %499 = vsyncpa [#allocation3], 1
    %s500 = scalar_lea.sflag [#allocation3], 1
    %501 = vsyncpa %s500, 1
    %502 = vsyncpa [#allocation4], 1
    %s503 = scalar_lea.sflag [#allocation4], 1
    %504 = vsyncpa %s503, 1

</llo_original>
